<compile_context>
chip_gen: v5e
topology: v5e:2x2
jax: 0.10.0
libtpu: 0.0.40
codegen_flags: <defaults>
</compile_context>

<pallas_src>
import numpy as np
import jax
import jax.numpy as jnp
from jax.experimental import pallas as pl
from jax.experimental.pallas import tpu as pltpu


# ----------------------------- circuit glue (numpy) -----------------------------
# TODO(synk): gate-by-gate unitary construction has no Pallas equivalent; kept on host.

def _kron_all(ops):
    out = np.array([[1.0 + 0.0j]])
    for op in ops:
        out = np.kron(out, op)
    return out


def _single_qubit_full(op, q, n):
    # qubit 0 = most significant bit (big-endian, Braket to_unitary convention)
    ops = [np.eye(2, dtype=np.complex128) for _ in range(n)]
    ops[q] = op
    return _kron_all(ops)


def _cnot_full(control, target, n):
    D = 2 ** n
    U = np.zeros((D, D), dtype=np.complex128)
    for i in range(D):
        cbit = (i >> (n - 1 - control)) & 1
        j = i ^ (1 << (n - 1 - target)) if cbit else i
        U[j, i] = 1.0
    return U


def _ry(theta):
    c, s = np.cos(theta / 2.0), np.sin(theta / 2.0)
    return np.array([[c, -s], [s, c]], dtype=np.complex128)


def _rz(theta):
    return np.array([[np.exp(-0.5j * theta), 0.0],
                     [0.0, np.exp(0.5j * theta)]], dtype=np.complex128)


_Z = np.array([[1.0, 0.0], [0.0, -1.0]], dtype=np.complex128)


def build_M(n_qubits):
    # cir1: z(0), i(1..n-1)  -> diag(+1 x D/2, -1 x D/2)
    return _single_qubit_full(_Z, 0, n_qubits)


def build_unitary(w, n_qubits):
    # cir2: per qubit  ry, rz, ry, cnot, ry, rz, ry
    D = 2 ** n_qubits
    U = np.eye(D, dtype=np.complex128)

    def apply(g):
        nonlocal U
        U = g @ U  # later gates multiply on the left

    for q in range(n_qubits):
        apply(_single_qubit_full(_ry(w[6 * q + 0]), q, n_qubits))
        apply(_single_qubit_full(_rz(w[6 * q + 1]), q, n_qubits))
        apply(_single_qubit_full(_ry(w[6 * q + 2]), q, n_qubits))
        if q < n_qubits - 1:
            apply(_cnot_full(q, q + 1, n_qubits))
        else:
            apply(_cnot_full(q, 0, n_qubits))
        apply(_single_qubit_full(_ry(w[6 * q + 3]), q, n_qubits))
        apply(_single_qubit_full(_rz(w[6 * q + 4]), q, n_qubits))
        apply(_single_qubit_full(_ry(w[6 * q + 5]), q, n_qubits))
    return U


# ----------------------------- host-side weight prep (hoisted, cached) -----------

def prepare_unitary_rhs(U):
    """U: (D, D) complex unitary  ->  (2D, 2D) f32 real-block RHS, uploaded once.

    RHS = [[Re(U^T), Im(U^T)], [-Im(U^T), Re(U^T)]]
    so that [xr | xi] @ RHS = [Re(out^T) | Im(out^T)] with out = U x^T.
    """
    urt = np.real(U).T.astype(np.float32)
    uit = np.imag(U).T.astype(np.float32)
    rhs = np.block([[urt, uit], [-uit, urt]])
    return jnp.asarray(rhs)


# ----------------------------- Pallas kernel -----------------------------

def cir_kernel(rhs_ref, xs_ref, res_ref):
    # rhs_ref: (2D, 2D) f32  real-block embedding of U^T
    # xs_ref:  (TB, 2D) f32  [Re(x) | Im(x)] batch tile
    # res_ref: (TB, 128) f32 per-row expectation, broadcast across lanes
    D = rhs_ref.shape[0] // 2

    # Single fused MXU call: o = [Re(out^T) | Im(out^T)]  (TB, 2D)
    o = jnp.dot(xs_ref[...], rhs_ref[...], preferred_element_type=jnp.float32)

    # M = Z (x) I^(n-1) is diagonal with +1 on indices < D/2 and -1 otherwise.
    # Apply the same sign to both the Re and Im halves of o (lane index mod D).
    lane = jax.lax.broadcasted_iota(jnp.int32, o.shape, 1)
    sign = jnp.where((lane & (D - 1)) < (D // 2), 1.0, -1.0).astype(jnp.float32)

    # res[b] = sum_i sign[i] * |out[i, b]|^2
    s = jnp.sum(sign * (o * o), axis=-1, keepdims=True)        # (TB, 1)

    # Lane-dense (unmasked) store; wrapper slices column 0.
    res_ref[...] = jnp.broadcast_to(s, res_ref.shape)


def cir_forward(rhs, x):
    """rhs: (2D, 2D) f32 from prepare_unitary_rhs(U); x: (B, D) complex64.

    Returns (B, 1) float32 = Re(diag(out^H M out)), out = U x^T, M = Z(x)I...I.
    """
    B, D = x.shape
    xr = jnp.real(x).astype(jnp.float32)
    xi = jnp.imag(x).astype(jnp.float32)
    xs = jnp.concatenate([xr, xi], axis=-1)                     # (B, 2D)

    # Batch tiling: pad to a sublane multiple (8); tile 256 rows for big batches.
    if B > 256:
        TB = 256
    else:
        TB = max(8, ((B + 7) // 8) * 8)
    Bp = ((B + TB - 1) // TB) * TB
    if Bp != B:
        xs = jnp.pad(xs, ((0, Bp - B), (0, 0)))

    out = pl.pallas_call(
        cir_kernel,
        out_shape=jax.ShapeDtypeStruct((Bp, 128), jnp.float32),
        grid=(Bp // TB,),
        in_specs=[
            pl.BlockSpec((2 * D, 2 * D), lambda i: (0, 0)),     # weights resident
            pl.BlockSpec((TB, 2 * D), lambda i: (i, 0)),        # batch tile
        ],
        out_specs=pl.BlockSpec((TB, 128), lambda i: (i, 0)),
        compiler_params=pltpu.CompilerParams(
            dimension_semantics=("parallel",)),
    )(rhs, xs)

    return out[:B, 0:1]


cir_forward_jit = jax.jit(cir_forward)


# ----------------------------- reference (plain numpy) -----------------------------

def cir_reference(U, M, x):
    out = U @ np.asarray(x).T                       # (D, B) complex
    res = np.real(np.diag(out.conj().T @ M @ out))  # (B,)
    return res.reshape(-1, 1).astype(np.float32)


# ----------------------------- main -----------------------------

if __name__ == "__main__":
    n_qubits = 4
    D = 2 ** n_qubits
    batch = 4

    # deterministic parameters + inputs from PRNGKey(0)
    key = jax.random.PRNGKey(0)
    kw, kr, ki = jax.random.split(key, 3)
    weight = np.asarray(
        jax.random.uniform(kw, (6 * n_qubits,), minval=0.0, maxval=2.0 * np.pi),
        dtype=np.float64)

    M = build_M(n_qubits)                 # (D, D) complex (diag +/-1)
    U = build_unitary(weight, n_qubits)   # (D, D) complex

    # weight preprocessing hoisted + cached on device (only x converts per call)
    rhs = prepare_unitary_rhs(U)          # (2D, 2D) f32

    # deterministic input states: (batch, D) complex64, rows normalized
    xr = jax.random.normal(kr, (batch, D), dtype=jnp.float32)
    xi = jax.random.normal(ki, (batch, D), dtype=jnp.float32)
    x = (xr + 1j * xi).astype(jnp.complex64)
    x = x / jnp.linalg.norm(x, axis=-1, keepdims=True)

    res = cir_forward_jit(rhs, x)
    res = jax.block_until_ready(res)

    ref = cir_reference(U.astype(np.complex64), M.astype(np.complex64), np.asarray(x))
    np.testing.assert_allclose(np.asarray(res), ref, rtol=1e-4, atol=1e-5)

    print("KERNEL_OK")
</pallas_src>

<mosaic_0001>
module attributes {stable_mosaic.version = 11 : i64} {
  func.func @cir_kernel(%arg0: i32, %arg1: memref<32x32xf32, #tpu.memory_space<vmem>>, %arg2: memref<8x32xf32, #tpu.memory_space<vmem>>, %arg3: memref<8x128xf32, #tpu.memory_space<vmem>>) attributes {dimension_semantics = [#tpu.dimension_semantics<parallel>], iteration_bounds = array<i64: 1>, scalar_prefetch = 0 : i64, scratch_operands = 0 : i64, tpu.core_type = #tpu.core_type<tc>, window_params = [{pipeline_mode = #tpu.pipeline_mode<synchronous>, transform_indices = @transform_0, window_bounds = array<i64: 32, 32>}, {transform_indices = @transform_1, window_bounds = array<i64: 8, 32>}, {transform_indices = @transform_2, window_bounds = array<i64: 8, 128>}]} {
    %c0 = arith.constant 0 : index
    %c0_0 = arith.constant 0 : index
    %0 = vector.load %arg2[%c0, %c0_0] : memref<8x32xf32, #tpu.memory_space<vmem>>, vector<8x32xf32>
    %c0_1 = arith.constant 0 : index
    %c0_2 = arith.constant 0 : index
    %1 = vector.load %arg1[%c0_1, %c0_2] : memref<32x32xf32, #tpu.memory_space<vmem>>, vector<32x32xf32>
    %cst = arith.constant dense<0.000000e+00> : vector<8x32xf32>
    %2 = tpu.matmul %0, %1, %cst {dimension_numbers = #tpu.dot_dimension_numbers<[1], [0], [0], [1], [0, 0, 1, 1], [], []>} : vector<8x32xf32>, vector<32x32xf32>, vector<8x32xf32> -> vector<8x32xf32>
    %3 = tpu.iota {dimensions = array<i32: 1>} : vector<8x32xi32>
    %c15_i32 = arith.constant 15 : i32
    %4 = vector.broadcast %c15_i32 : i32 to vector<8x32xi32>
    %5 = arith.andi %3, %4 : vector<8x32xi32>
    %c8_i32 = arith.constant 8 : i32
    %6 = vector.broadcast %c8_i32 : i32 to vector<8x32xi32>
    %7 = arith.cmpi slt, %5, %6 : vector<8x32xi32>
    %cst_3 = arith.constant 1.000000e+00 : f32
    %cst_4 = arith.constant -1.000000e+00 : f32
    %8 = vector.broadcast %cst_3 : f32 to vector<8x32xf32>
    %9 = vector.broadcast %cst_4 : f32 to vector<8x32xf32>
    %10 = arith.select %7, %8, %9 : vector<8x32xi1>, vector<8x32xf32>
    %11 = arith.mulf %2, %2 : vector<8x32xf32>
    %12 = arith.mulf %10, %11 : vector<8x32xf32>
    %cst_5 = arith.constant dense<0.000000e+00> : vector<8xf32>
    %13 = vector.multi_reduction <add>, %12, %cst_5 [1] : vector<8x32xf32> to vector<8xf32>
    %14 = vector.shape_cast %13 : vector<8xf32> to vector<8x1xf32>
    %15 = vector.shape_cast %14 : vector<8x1xf32> to vector<8x1xf32>
    %16 = vector.broadcast %15 : vector<8x1xf32> to vector<8x128xf32>
    %c0_6 = arith.constant 0 : index
    %c0_7 = arith.constant 0 : index
    %17 = vector.load %arg3[%c0_6, %c0_7] : memref<8x128xf32, #tpu.memory_space<vmem>>, vector<8x128xf32>
    tpu.vector_store %arg3[%c0_6, %c0_7], %16 {strides = array<i32>} : memref<8x128xf32, #tpu.memory_space<vmem>>, vector<8x128xf32>,
    return
  }
  func.func @transform_0(%arg0: i32) -> (i32, i32) {
    %c0_i32 = arith.constant 0 : i32
    %c0_i32_0 = arith.constant 0 : i32
    %c0_i32_1 = arith.constant 0 : i32
    return %c0_i32, %c0_i32_0 : i32, i32
  }
  func.func @transform_1(%arg0: i32) -> (i32, i32) {
    %c0_i32 = arith.constant 0 : i32
    %c0_i32_0 = arith.constant 0 : i32
    return %arg0, %c0_i32 : i32, i32
  }
  func.func @transform_2(%arg0: i32) -> (i32, i32) {
    %c0_i32 = arith.constant 0 : i32
    %c0_i32_0 = arith.constant 0 : i32
    return %arg0, %c0_i32 : i32, i32
  }
}

</mosaic_0001>

<llo_original>
// kernel: custom-call.1
$region0: #{custom-call.1}
  %s0 = inlined_call_operand.hbm [shape: c64[4,16], index: 0, kind: input, shape index: {}]
  %s1 = inlined_call_operand.vmem [shape: f32[4,16], index: 1, kind: output, shape index: {}]
  %s2 = scalar_lea.hbm %s0, 4
  $region1: #{custom-call.1} parent=0
    #allocation0 [shape = 's32[1]{0}', space=sflag, size = 0x4, scoped, tag = 'scoped memory for custom-call.1']
    %3 = vsyncpa [#allocation0], 0
    %s5 = sshll.u32 %s2, 4
    %s6 = int_to_ptr.hbm [resolvable:$true] %s5
    %s7 = sshll.u32 %s1, 4
    %s8 = int_to_ptr.vmem [resolvable:$true] %s7
    %10 = dma.hbm_to_vmem [thread:$0]  %s6, 64, %s8, [#allocation0]
    %12 = dma.done [#allocation0], 64
    %13 = vsyncpa [#allocation0], 1

// kernel: custom-call
$region0: #{custom-call}
  %s0 = inlined_call_operand.hbm [shape: c64[4,16], index: 0, kind: input, shape index: {}]
  %s1 = inlined_call_operand.vmem [shape: f32[4,16], index: 1, kind: output, shape index: {}]
  $region1: #{custom-call} parent=0
    #allocation0 [shape = 's32[1]{0}', space=sflag, size = 0x4, scoped, tag = 'scoped memory for custom-call']
    %2 = vsyncpa [#allocation0], 0
    %s4 = sshll.u32 %s0, 4
    %s5 = int_to_ptr.hbm [resolvable:$true] %s4
    %s6 = sshll.u32 %s1, 4
    %s7 = int_to_ptr.vmem [resolvable:$true] %s6
    %9 = dma.hbm_to_vmem [thread:$0]  %s5, 64, %s7, [#allocation0]
    %11 = dma.done [#allocation0], 64
    %12 = vsyncpa [#allocation0], 1

// kernel: cir_forward.1
$region0: #{cir_forward.1}
  #allocation0 [shape = 'u32[]', space=smem, size = 0x4, offset = 0x4, fixed_abs, tag = 'smem constant byte address 0x4 - core index']
  #allocation1 [shape = 'u32[72,128]{1,0:T(1,128)}', space=vmem, size = 0x9000, scoped, tag = 'internal scratch']
  %s0 = inlined_call_operand.hbm [shape: f32[32,32], index: 0, kind: input, shape index: {}]
  %s1 = inlined_call_operand.vmem [shape: f32[8,32], index: 1, kind: input, shape index: {}]
  %s2 = inlined_call_operand.vmem [shape: f32[8,128], index: 2, kind: output, shape index: {}]
  %s3 = sld [smem:[#allocation0]]
  $region22: #{cir_forward.1} parent=0
    _
  %s5 = ssub.s32 1, %s3
  %s6 = scalar_select 0, %s5, %s3
  $region1: #{cir_forward.1} parent=0
    #allocation2 [shape = 'u8[16384]{0}', space=vmem, size = 0x4000, scoped, tag = 'input window, operand 0, single buffered']
    #allocation3 [shape = 's32[1]{0}', space=sflag, size = 0x4, scoped, tag = 'scoped memory for cir_forward.1']
    %7 = vsyncpa [#allocation3], 0
    // Predicated region
    $region2: #{cir_forward.1} parent=1 // pred_check
      _
    $region3: #{cir_forward.1} parent=1 // pred_check_branch
      %9 = sbr.rel (0) target = $region5
    $region4: #{cir_forward.1} parent=1 // pred_region
      %11 = vsyncadd [#allocation3], 0
      %s12 = sshll.u32 %s0, 4
      %s13 = int_to_ptr.hbm [resolvable:$true] %s12
      %s14 = sshll.u32 [#allocation2], 4
      %s15 = int_to_ptr.vmem [resolvable:$true] %s14
      %20 = dma.hbm_to_vmem [thread:$0]  %s13, 512, %s15, [#allocation3], 128, 128, 8
    $region5: #{cir_forward.1} parent=1 // pred_fallthru
      _
    // Predicated region
    $region6: #{cir_forward.1} parent=1 // pred_check
      _
    $region7: #{cir_forward.1} parent=1 // pred_check_branch
      %22 = sbr.rel (0) target = $region9
    $region8: #{cir_forward.1} parent=1 // pred_region
      _
    $region9: #{cir_forward.1} parent=1 // pred_fallthru
      _
    // Predicated region
    $region10: #{cir_forward.1} parent=1 // pred_check
      _
    $region11: #{cir_forward.1} parent=1 // pred_check_branch
      %24 = sbr.rel (0) target = $region13
    $region12: #{cir_forward.1} parent=1 // pred_region
      %26 = dma.done [#allocation3], 512
    $region13: #{cir_forward.1} parent=1 // pred_fallthru
      _
    %v27 = vld [vmem:[%s1] sm:$0xff]
    %v28 = vld [vmem:[#allocation2] sm:$0xff]
    %v29 = vld [vmem:[#allocation2 + $0x8] sm:$0xff]
    %v30 = vld [vmem:[#allocation2 + $0x10] sm:$0xff]
    %v31 = vld [vmem:[#allocation2 + $0x18] sm:$0xff]
    %vm32 = vcmask 261120
    %v34 = vsel %vm32, %v27, 0
    %36 = vmatpush.msra.mxu0 0.0
    %37 = vmatpush.msra.mxu0 0.0
    %38 = vmatpush.msra.mxu0 0.0
    %39 = vmatpush.msra.mxu0 0.0
    %40 = vmatpush.msra.mxu0 0.0
    %41 = vmatpush.msra.mxu0 0.0
    %42 = vmatpush.msra.mxu0 0.0
    %43 = vmatpush.msra.mxu0 0.0
    %44 = vmatpush.msra.mxu0 0.0
    %45 = vmatpush.msra.mxu0 0.0
    %46 = vmatpush.msra.mxu0 0.0
    %47 = vmatpush.msra.mxu0 0.0
    %48 = vmatpush.msra.mxu0 %v31
    %49 = vmatpush.msra.mxu0 %v30
    %50 = vmatpush.msra.mxu0 %v29
    %51 = vmatpush.msra.mxu0 %v28
    %52 = vmatmul.f32.gmra.mxu0 %v34
    %v53 = vpop.f32.mrf.mxu0
    %v54 = vadd.f32 0.0, %v53
    %55 = vdwg.mxu0
    %v56 = vlaneseq
    %v57 = vand.u32 %v56, 127
    %v58 = vand.u32 %v57, 15
    %vm59 = vcmp.lt.s32.totalorder %v58, 8
    %v60 = vsel %vm59, 1.0, -1.0
    %v61 = vmul.f32 %v54, %v54
    %v62 = vmul.f32 %v60, %v61
    %v63 = vsel %vm32, %v62, 0.0
    %64 = vadd.xlane.f32.xlu0 %v63
    %v65 = vpop.xlane.xlu0 %64
    %66 = vst [vmem:[%s2] sm:$0xff] %v65
    // Predicated region
    $region14: #{cir_forward.1} parent=1 // pred_check
      _
    $region15: #{cir_forward.1} parent=1 // pred_check_branch
      %68 = sbr.rel (0) target = $region17
    $region16: #{cir_forward.1} parent=1 // pred_region
      _
    $region17: #{cir_forward.1} parent=1 // pred_fallthru
      _
    // Predicated region
    $region18: #{cir_forward.1} parent=1 // pred_check
      _
    $region19: #{cir_forward.1} parent=1 // pred_check_branch
      %70 = sbr.rel (0) target = $region21
    $region20: #{cir_forward.1} parent=1 // pred_region
      _
    $region21: #{cir_forward.1} parent=1 // pred_fallthru
      _
    %71 = vsyncpa [#allocation3], 1

</llo_original>
